<compile_context>
chip_gen: v7x
topology: tpu7x:2x2x1
jax: 0.10.0
libtpu: 0.0.40
codegen_flags: <defaults>
</compile_context>

<pallas_src>
import functools

import jax
import jax.numpy as jnp
from jax.experimental import pallas as pl
from jax.experimental.pallas import tpu as pltpu


def _classifier_kernel(x_ref, w1_ref, b1_ref, w2_ref, b2_ref, out_ref, *, mxu_dtype):
    """One grid step processes a (tm, input_size) slab of rows.

    hidden = tanh(x @ W1 + b1)   -> MXU matmul (f32 acc) + EUP tanh, stays in vregs
    out    = hidden @ W2 + b2    -> MXU matmul, single full-lane (tm, 128k) store
    """
    x = x_ref[...].astype(mxu_dtype)                                   # (tm, In)
    h = jnp.tanh(
        jnp.dot(x, w1_ref[...], preferred_element_type=jnp.float32)
        + b1_ref[...]                                                  # (1, Hpad) bcast
    )
    out_ref[...] = (
        jnp.dot(h.astype(mxu_dtype), w2_ref[...],
                preferred_element_type=jnp.float32)
        + b2_ref[...]                                                  # (1, Cpad) bcast
    ).astype(out_ref.dtype)


def _round_up(x: int, m: int) -> int:
    return ((x + m - 1) // m) * m


def _cdiv(a: int, b: int) -> int:
    return -(-a // b)


@functools.partial(jax.jit, static_argnames=("mxu_dtype", "target_tile_bytes"))
def classifier_forward(x, w1, b1, w2, b2, *, mxu_dtype=jnp.bfloat16,
                       target_tile_bytes=4 * 1024 * 1024):
    """x: (..., input_size); w1: (input_size, hidden); b1: (hidden,);
    w2: (hidden, num_class); b2: (num_class,).  Weights are the transposes of
    torch nn.Linear's (out, in) storage, i.e. y = x @ w + b.
    Returns (..., num_class) float32.
    """
    *lead, input_size = x.shape
    hidden = w1.shape[1]
    num_class = w2.shape[1]

    M = 1
    for d in lead:
        M *= d

    # Keep x in HBM as-is (f32 or bf16); only widen exotic dtypes. No full-array
    # pad/copy of x in the wrapper.
    if x.dtype != jnp.float32 and x.dtype != jnp.bfloat16:
        x = x.astype(jnp.float32)
    x_flat = x.reshape(M, input_size)

    # Lane-dense padded weight shapes. Pads are exact zeros:
    #   padded hidden cols -> tanh(0) = 0, multiplied by zero W2 rows -> 0
    #   padded class cols  -> 0, sliced off after the call
    H_pad = _round_up(hidden, 128)
    C_pad = _round_up(num_class, 128)

    w1_p = jnp.zeros((input_size, H_pad), mxu_dtype).at[:, :hidden].set(
        w1.astype(mxu_dtype))
    b1_p = jnp.zeros((1, H_pad), jnp.float32).at[:, :hidden].set(
        b1.astype(jnp.float32)[None, :])
    w2_p = jnp.zeros((H_pad, C_pad), mxu_dtype).at[:hidden, :num_class].set(
        w2.astype(mxu_dtype))
    b2_p = jnp.zeros((1, C_pad), jnp.float32).at[:, :num_class].set(
        b2.astype(jnp.float32)[None, :])

    # Row tile: aim for ~target_tile_bytes per x tile (mem-bound kernel), at
    # least 512 rows, multiple of 8 (sublanes), never more than needed.
    x_itemsize = x_flat.dtype.itemsize
    tm_target = max(512, _round_up(target_tile_bytes // (x_itemsize * input_size), 8))
    tm = min(tm_target, _round_up(M, 8))
    # v7x megacore: make sure there are >= 2 "parallel" grid steps when M is
    # large enough to split (harmless on single-TC v5e/v6e).
    if M > 8 and _cdiv(M, tm) < 2:
        tm = _round_up(_cdiv(M, 2), 8)
    grid_m = _cdiv(M, tm)   # ragged last tile handled by Pallas; no jnp.pad of x

    # VMEM budget: double-buffered x/out tiles + resident (double-buffered)
    # weights + biases, with headroom.  Covers v5e's 16 MiB scoped default and
    # stays within v7x's 64 MiB physical VMEM.
    w_itemsize = jnp.zeros((), mxu_dtype).dtype.itemsize
    est = (2 * tm * input_size * x_itemsize
           + 2 * tm * C_pad * 4
           + 2 * (input_size * H_pad + H_pad * C_pad) * w_itemsize
           + 2 * (H_pad + C_pad) * 4)
    vmem_limit = int(min(64 * 2 ** 20, max(32 * 2 ** 20, 2 * est)))

    kernel = functools.partial(_classifier_kernel, mxu_dtype=mxu_dtype)

    out = pl.pallas_call(
        kernel,
        out_shape=jax.ShapeDtypeStruct((M, C_pad), jnp.float32),
        grid=(grid_m,),
        in_specs=[
            pl.BlockSpec((tm, input_size), lambda i: (i, 0)),       # x row tiles
            pl.BlockSpec((input_size, H_pad), lambda i: (0, 0)),    # W1 (VMEM-resident)
            pl.BlockSpec((1, H_pad), lambda i: (0, 0)),             # b1 (resident)
            pl.BlockSpec((H_pad, C_pad), lambda i: (0, 0)),         # W2 (resident)
            pl.BlockSpec((1, C_pad), lambda i: (0, 0)),             # b2 (resident)
        ],
        out_specs=pl.BlockSpec((tm, C_pad), lambda i: (i, 0)),      # lane-dense store
        compiler_params=pltpu.CompilerParams(
            dimension_semantics=("parallel",),
            vmem_limit_bytes=vmem_limit,
        ),
    )(x_flat, w1_p, b1_p, w2_p, b2_p)

    out = out[:, :num_class]
    return out.reshape(*lead, num_class)


if __name__ == "__main__":
    # Small config consistent with the module: x of shape (batch, seq, input_size).
    B, S = 2, 8
    input_size, hidden_size, num_class = 32, 64, 16

    key = jax.random.PRNGKey(0)
    kx, kw1, kb1, kw2, kb2 = jax.random.split(key, 5)

    x = jax.random.normal(kx, (B, S, input_size), dtype=jnp.float32)

    # Deterministic synthetic nn.Linear params (torch-style uniform init),
    # stored already-transposed as (in, out).
    lim1 = 1.0 / (input_size ** 0.5)
    lim2 = 1.0 / (hidden_size ** 0.5)
    w1 = jax.random.uniform(kw1, (input_size, hidden_size), jnp.float32, -lim1, lim1)
    b1 = jax.random.uniform(kb1, (hidden_size,), jnp.float32, -lim1, lim1)
    w2 = jax.random.uniform(kw2, (hidden_size, num_class), jnp.float32, -lim2, lim2)
    b2 = jax.random.uniform(kb2, (num_class,), jnp.float32, -lim2, lim2)

    # Pure-JAX reference (same semantics as the torch forward).
    ref = jnp.tanh(x @ w1 + b1) @ w2 + b2

    # f32 MXU path: zero-padding is exact, so this matches the reference tightly.
    out_f32 = jax.block_until_ready(
        classifier_forward(x, w1, b1, w2, b2, mxu_dtype=jnp.float32))
    assert out_f32.shape == (B, S, num_class)
    assert jnp.allclose(out_f32, ref, atol=1e-4, rtol=1e-4), "f32 kernel mismatch"

    # bf16 MXU path (default, perf): small quantization error expected.
    out_bf16 = jax.block_until_ready(classifier_forward(x, w1, b1, w2, b2))
    assert out_bf16.shape == (B, S, num_class)
    assert jnp.allclose(out_bf16, ref, atol=3e-2, rtol=3e-2), "bf16 kernel mismatch"

    print("KERNEL_OK")
</pallas_src>

<mosaic_0001>
module attributes {stable_mosaic.version = 11 : i64} {
  func.func @_classifier_kernel(%arg0: i32, %arg1: memref<8x32xf32, #tpu.memory_space<vmem>>, %arg2: memref<32x128xf32, #tpu.memory_space<vmem>>, %arg3: memref<1x128xf32, #tpu.memory_space<vmem>>, %arg4: memref<128x128xf32, #tpu.memory_space<vmem>>, %arg5: memref<1x128xf32, #tpu.memory_space<vmem>>, %arg6: memref<8x128xf32, #tpu.memory_space<vmem>>) attributes {dimension_semantics = [#tpu.dimension_semantics<parallel>], iteration_bounds = array<i64: 2>, scalar_prefetch = 0 : i64, scratch_operands = 0 : i64, tpu.core_type = #tpu.core_type<tc>, window_params = [{transform_indices = @transform_0, window_bounds = array<i64: 8, 32>}, {pipeline_mode = #tpu.pipeline_mode<synchronous>, transform_indices = @transform_1, window_bounds = array<i64: 32, 128>}, {pipeline_mode = #tpu.pipeline_mode<synchronous>, transform_indices = @transform_2, window_bounds = array<i64: 1, 128>}, {pipeline_mode = #tpu.pipeline_mode<synchronous>, transform_indices = @transform_3, window_bounds = array<i64: 128, 128>}, {pipeline_mode = #tpu.pipeline_mode<synchronous>, transform_indices = @transform_4, window_bounds = array<i64: 1, 128>}, {transform_indices = @transform_5, window_bounds = array<i64: 8, 128>}]} {
    %c0 = arith.constant 0 : index
    %c0_0 = arith.constant 0 : index
    %0 = vector.load %arg1[%c0, %c0_0] : memref<8x32xf32, #tpu.memory_space<vmem>>, vector<8x32xf32>
    %c0_1 = arith.constant 0 : index
    %c0_2 = arith.constant 0 : index
    %1 = vector.load %arg2[%c0_1, %c0_2] : memref<32x128xf32, #tpu.memory_space<vmem>>, vector<32x128xf32>
    %cst = arith.constant dense<0.000000e+00> : vector<8x128xf32>
    %2 = tpu.matmul %0, %1, %cst {dimension_numbers = #tpu.dot_dimension_numbers<[1], [0], [0], [1], [0, 0, 1, 1], [], []>} : vector<8x32xf32>, vector<32x128xf32>, vector<8x128xf32> -> vector<8x128xf32>
    %c0_3 = arith.constant 0 : index
    %c0_4 = arith.constant 0 : index
    %3 = vector.load %arg3[%c0_3, %c0_4] : memref<1x128xf32, #tpu.memory_space<vmem>>, vector<1x128xf32>
    %4 = vector.broadcast %3 : vector<1x128xf32> to vector<8x128xf32>
    %5 = arith.addf %2, %4 : vector<8x128xf32>
    %6 = math.tanh %5 : vector<8x128xf32>
    %c0_5 = arith.constant 0 : index
    %c0_6 = arith.constant 0 : index
    %7 = vector.load %arg4[%c0_5, %c0_6] : memref<128x128xf32, #tpu.memory_space<vmem>>, vector<128x128xf32>
    %cst_7 = arith.constant dense<0.000000e+00> : vector<8x128xf32>
    %8 = tpu.matmul %6, %7, %cst_7 {dimension_numbers = #tpu.dot_dimension_numbers<[1], [0], [0], [1], [0, 0, 1, 1], [], []>} : vector<8x128xf32>, vector<128x128xf32>, vector<8x128xf32> -> vector<8x128xf32>
    %c0_8 = arith.constant 0 : index
    %c0_9 = arith.constant 0 : index
    %9 = vector.load %arg5[%c0_8, %c0_9] : memref<1x128xf32, #tpu.memory_space<vmem>>, vector<1x128xf32>
    %10 = vector.broadcast %9 : vector<1x128xf32> to vector<8x128xf32>
    %11 = arith.addf %8, %10 : vector<8x128xf32>
    %c0_10 = arith.constant 0 : index
    %c0_11 = arith.constant 0 : index
    %12 = vector.load %arg6[%c0_10, %c0_11] : memref<8x128xf32, #tpu.memory_space<vmem>>, vector<8x128xf32>
    tpu.vector_store %arg6[%c0_10, %c0_11], %11 {strides = array<i32>} : memref<8x128xf32, #tpu.memory_space<vmem>>, vector<8x128xf32>,
    return
  }
  func.func @transform_0(%arg0: i32) -> (i32, i32) {
    %c0_i32 = arith.constant 0 : i32
    %c0_i32_0 = arith.constant 0 : i32
    return %arg0, %c0_i32 : i32, i32
  }
  func.func @transform_1(%arg0: i32) -> (i32, i32) {
    %c0_i32 = arith.constant 0 : i32
    %c0_i32_0 = arith.constant 0 : i32
    %c0_i32_1 = arith.constant 0 : i32
    return %c0_i32, %c0_i32_0 : i32, i32
  }
  func.func @transform_2(%arg0: i32) -> (i32, i32) {
    %c0_i32 = arith.constant 0 : i32
    %c0_i32_0 = arith.constant 0 : i32
    %c0_i32_1 = arith.constant 0 : i32
    return %c0_i32, %c0_i32_0 : i32, i32
  }
  func.func @transform_3(%arg0: i32) -> (i32, i32) {
    %c0_i32 = arith.constant 0 : i32
    %c0_i32_0 = arith.constant 0 : i32
    %c0_i32_1 = arith.constant 0 : i32
    return %c0_i32, %c0_i32_0 : i32, i32
  }
  func.func @transform_4(%arg0: i32) -> (i32, i32) {
    %c0_i32 = arith.constant 0 : i32
    %c0_i32_0 = arith.constant 0 : i32
    %c0_i32_1 = arith.constant 0 : i32
    return %c0_i32, %c0_i32_0 : i32, i32
  }
  func.func @transform_5(%arg0: i32) -> (i32, i32) {
    %c0_i32 = arith.constant 0 : i32
    %c0_i32_0 = arith.constant 0 : i32
    return %arg0, %c0_i32 : i32, i32
  }
}

</mosaic_0001>

<llo_original>
// kernel: classifier_forward.1
$region0: #{classifier_forward.1}
  #allocation0 [shape = 'u32[]', space=smem, size = 0x4, offset = 0x4, fixed_abs, tag = 'smem constant byte address 0x4 - core index']
  #allocation1 [shape = 'u32[144,128]{1,0:T(1,128)}', space=vmem, size = 0x12000, scoped, tag = 'internal scratch']
  %s0 = inlined_call_operand.vmem [shape: f32[16,32], index: 0, kind: input, shape index: {}]
  %s1 = inlined_call_operand.vmem [shape: f32[32,128], index: 1, kind: input, shape index: {}]
  %s2 = inlined_call_operand.vmem [shape: f32[1,128], index: 2, kind: input, shape index: {}]
  %s3 = inlined_call_operand.vmem [shape: f32[128,128], index: 3, kind: input, shape index: {}]
  %s4 = inlined_call_operand.vmem [shape: f32[1,128], index: 4, kind: input, shape index: {}]
  %s5 = inlined_call_operand.vmem [shape: f32[16,128], index: 5, kind: output, shape index: {}]
  %s6 = sld [smem:[#allocation0]]
  $region53: #{classifier_forward.1} parent=0
    _
  %s8 = ssub.s32 1, %s6
  %s9 = scalar_select 0, %s8, %s6
  loop: start=0, step=1, limit=4
  $region2: #{classifier_forward.1} parent=0 // loop_pre_header
    _
  $region3: #{classifier_forward.1} parent=0 // loop_header
    %s11 = sphi 0, %s15
    %p12 = scmp.ge.s32.totalorder %s11, 4
    %s21 = sphi 0, %s23
    %s24 = sphi 0, %s21
    %s25 = sphi 0, %s24
    %s41 = sphi 0, %s25
    %s45 = sphi 0, %s45
    %s47 = sphi 0, %s45
    %s48 = sphi 0, %s47
    %s62 = sphi 0, %s48
    %s66 = sphi 0, %s66
    %s68 = sphi 0, %s66
    %s69 = sphi 0, %s68
    %s83 = sphi 0, %s69
    %s87 = sphi 0, %s87
    %s89 = sphi 0, %s87
    %s90 = sphi 0, %s89
    %s104 = sphi 0, %s90
    %s108 = sphi 0, %s108
    %s110 = sphi 0, %s108
    %s111 = sphi 0, %s110
    %s125 = sphi 0, %s111
    %s131 = sphi 0, %s133
    %s134 = sphi 0, %s131
    %s135 = sphi 0, %s134
    %s151 = sphi 0, %s135
  $region4: #{classifier_forward.1} parent=0 // loop_header_branch
    %14 = sbr.rel (%p12) target = $region8
  $region5: #{classifier_forward.1} parent=0 // loop_body
    %s16 = ssub.s32 %s11, 1
    %s17 = ssub.s32 %s11, 2
    %s18 = sadd.s32 %s11, 1
    %s19 = ssub.s32 %s11, %s18
    %p20 = scmp.eq.s32.totalorder %s19, 0
    %s22 = sadd.s32 %s21, 1
    %s23 = scalar_select %p20, %s21, %s22
    %p26 = pneg %p20
    %p27 = scmp.eq.s32.totalorder %s11, 1
    %p28 = por %p26, %p27
    %p29 = scmp.ne.s32.totalorder %s21, %s24
    %p30 = scmp.eq.s32.totalorder %s11, 0
    %p31 = por %p29, %p30
    %p32 = scmp.ne.s32.totalorder %s21, %s24
    %p33 = scmp.eq.s32.totalorder %s16, 1
    %p34 = por %p32, %p33
    %p35 = scmp.ne.s32.totalorder %s24, %s25
    %p36 = scmp.eq.s32.totalorder %s16, 0
    %p37 = por %p35, %p36
    %p38 = scmp.ne.s32.totalorder %s24, %s25
    %p39 = scmp.eq.s32.totalorder %s17, 1
    %p40 = por %p38, %p39
    %p42 = scmp.ne.s32.totalorder %s25, %s41
    %p43 = scmp.eq.s32.totalorder %s17, 0
    %p44 = por %p42, %p43
    %s46 = sadd.s32 %s45, 1
    %p49 = scmp.eq.s32.totalorder %s11, 1
    %p50 = scmp.ne.s32.totalorder %s45, %s47
    %p51 = scmp.eq.s32.totalorder %s11, 0
    %p52 = por %p50, %p51
    %p53 = scmp.ne.s32.totalorder %s45, %s47
    %p54 = scmp.eq.s32.totalorder %s16, 1
    %p55 = por %p53, %p54
    %p56 = scmp.ne.s32.totalorder %s47, %s48
    %p57 = scmp.eq.s32.totalorder %s16, 0
    %p58 = por %p56, %p57
    %p59 = scmp.ne.s32.totalorder %s47, %s48
    %p60 = scmp.eq.s32.totalorder %s17, 1
    %p61 = por %p59, %p60
    %p63 = scmp.ne.s32.totalorder %s48, %s62
    %p64 = scmp.eq.s32.totalorder %s17, 0
    %p65 = por %p63, %p64
    %s67 = sadd.s32 %s66, 1
    %p70 = scmp.eq.s32.totalorder %s11, 1
    %p71 = scmp.ne.s32.totalorder %s66, %s68
    %p72 = scmp.eq.s32.totalorder %s11, 0
    %p73 = por %p71, %p72
    %p74 = scmp.ne.s32.totalorder %s66, %s68
    %p75 = scmp.eq.s32.totalorder %s16, 1
    %p76 = por %p74, %p75
    %p77 = scmp.ne.s32.totalorder %s68, %s69
    %p78 = scmp.eq.s32.totalorder %s16, 0
    %p79 = por %p77, %p78
    %p80 = scmp.ne.s32.totalorder %s68, %s69
    %p81 = scmp.eq.s32.totalorder %s17, 1
    %p82 = por %p80, %p81
    %p84 = scmp.ne.s32.totalorder %s69, %s83
    %p85 = scmp.eq.s32.totalorder %s17, 0
    %p86 = por %p84, %p85
    %s88 = sadd.s32 %s87, 1
    %p91 = scmp.eq.s32.totalorder %s11, 1
    %p92 = scmp.ne.s32.totalorder %s87, %s89
    %p93 = scmp.eq.s32.totalorder %s11, 0
    %p94 = por %p92, %p93
    %p95 = scmp.ne.s32.totalorder %s87, %s89
    %p96 = scmp.eq.s32.totalorder %s16, 1
    %p97 = por %p95, %p96
    %p98 = scmp.ne.s32.totalorder %s89, %s90
    %p99 = scmp.eq.s32.totalorder %s16, 0
    %p100 = por %p98, %p99
    %p101 = scmp.ne.s32.totalorder %s89, %s90
    %p102 = scmp.eq.s32.totalorder %s17, 1
    %p103 = por %p101, %p102
    %p105 = scmp.ne.s32.totalorder %s90, %s104
    %p106 = scmp.eq.s32.totalorder %s17, 0
    %p107 = por %p105, %p106
    %s109 = sadd.s32 %s108, 1
    %p112 = scmp.eq.s32.totalorder %s11, 1
    %p113 = scmp.ne.s32.totalorder %s108, %s110
    %p114 = scmp.eq.s32.totalorder %s11, 0
    %p115 = por %p113, %p114
    %p116 = scmp.ne.s32.totalorder %s108, %s110
    %p117 = scmp.eq.s32.totalorder %s16, 1
    %p118 = por %p116, %p117
    %p119 = scmp.ne.s32.totalorder %s110, %s111
    %p120 = scmp.eq.s32.totalorder %s16, 0
    %p121 = por %p119, %p120
    %p122 = scmp.ne.s32.totalorder %s110, %s111
    %p123 = scmp.eq.s32.totalorder %s17, 1
    %p124 = por %p122, %p123
    %p126 = scmp.ne.s32.totalorder %s111, %s125
    %p127 = scmp.eq.s32.totalorder %s17, 0
    %p128 = por %p126, %p127
    %s129 = ssub.s32 %s11, %s18
    %p130 = scmp.eq.s32.totalorder %s129, 0
    %s132 = sadd.s32 %s131, 1
    %s133 = scalar_select %p130, %s131, %s132
    %p136 = pneg %p130
    %p137 = scmp.eq.s32.totalorder %s11, 1
    %p138 = por %p136, %p137
    %p139 = scmp.ne.s32.totalorder %s131, %s134
    %p140 = scmp.eq.s32.totalorder %s11, 0
    %p141 = por %p139, %p140
    %p142 = scmp.ne.s32.totalorder %s131, %s134
    %p143 = scmp.eq.s32.totalorder %s16, 1
    %p144 = por %p142, %p143
    %p145 = scmp.ne.s32.totalorder %s134, %s135
    %p146 = scmp.eq.s32.totalorder %s16, 0
    %p147 = por %p145, %p146
    %p148 = scmp.ne.s32.totalorder %s134, %s135
    %p149 = scmp.eq.s32.totalorder %s17, 1
    %p150 = por %p148, %p149
    %p152 = scmp.ne.s32.totalorder %s135, %s151
    %p153 = scmp.eq.s32.totalorder %s17, 0
    %p154 = por %p152, %p153
    %p155 = scmp.le.s32.totalorder 1, %s11
    %p156 = scmp.lt.s32.totalorder %s11, 3
    %p157 = pnand %p155, %p156
    %p158 = pneg %p157
    // Predicated region
    $region9: #{classifier_forward.1} parent=5 // pred_check
      _
    $region10: #{classifier_forward.1} parent=5 // pred_check_branch
      %160 = sbr.rel (%p157) target = $region12
    $region11: #{classifier_forward.1} parent=5 // pred_region
      %s161 = ssub.s32 %s11, 1
      // Predicated region
      $region13: #{classifier_forward.1} parent=11 // pred_check
        %p162 = pneg %p58
      $region14: #{classifier_forward.1} parent=11 // pred_check_branch
        %164 = sbr.rel (%p162) target = $region16
      $region15: #{classifier_forward.1} parent=11 // pred_region
        _
      $region16: #{classifier_forward.1} parent=11 // pred_fallthru
        _
      // Predicated region
      $region17: #{classifier_forward.1} parent=11 // pred_check
        %p165 = pneg %p79
      $region18: #{classifier_forward.1} parent=11 // pred_check_branch
        %167 = sbr.rel (%p165) target = $region20
      $region19: #{classifier_forward.1} parent=11 // pred_region
        _
      $region20: #{classifier_forward.1} parent=11 // pred_fallthru
        _
      // Predicated region
      $region21: #{classifier_forward.1} parent=11 // pred_check
        %p168 = pneg %p100
      $region22: #{classifier_forward.1} parent=11 // pred_check_branch
        %170 = sbr.rel (%p168) target = $region24
      $region23: #{classifier_forward.1} parent=11 // pred_region
        _
      $region24: #{classifier_forward.1} parent=11 // pred_fallthru
        _
      // Predicated region
      $region25: #{classifier_forward.1} parent=11 // pred_check
        %p171 = pneg %p121
      $region26: #{classifier_forward.1} parent=11 // pred_check_branch
        %173 = sbr.rel (%p171) target = $region28
      $region27: #{classifier_forward.1} parent=11 // pred_region
        _
      $region28: #{classifier_forward.1} parent=11 // pred_fallthru
        _
    $region12: #{classifier_forward.1} parent=5 // pred_fallthru
      _
    %p174 = scmp.lt.s32.totalorder %s11, 2
    // Predicated region
    $region29: #{classifier_forward.1} parent=5 // pred_check
      %p175 = pneg %p174
    $region30: #{classifier_forward.1} parent=5 // pred_check_branch
      %177 = sbr.rel (%p175) target = $region32
    $region31: #{classifier_forward.1} parent=5 // pred_region
      // Predicated region
      $region33: #{classifier_forward.1} parent=31 // pred_check
        %p178 = pneg %p31
      $region34: #{classifier_forward.1} parent=31 // pred_check_branch
        %180 = sbr.rel (%p178) target = $region36
      $region35: #{classifier_forward.1} parent=31 // pred_region
        %p181 = scmp.lt.s32.totalorder %s11, 1
        %s182 = scalar_select %p181, %s11, 1
        %s183 = smul.addr %s182, 8
        %s184 = scalar_lea.vmem %s0, %s183
      $region36: #{classifier_forward.1} parent=31 // pred_fallthru
        _
    $region32: #{classifier_forward.1} parent=5 // pred_fallthru
      _
    %p185 = scmp.le.s32.totalorder 1, %s11
    %p186 = scmp.lt.s32.totalorder %s11, 3
    %p187 = pnand %p185, %p186
    %p188 = pneg %p187
    // Predicated region
    $region37: #{classifier_forward.1} parent=5 // pred_check
      _
    $region38: #{classifier_forward.1} parent=5 // pred_check_branch
      %190 = sbr.rel (%p187) target = $region40
    $region39: #{classifier_forward.1} parent=5 // pred_region
      %s191 = ssub.s32 %s11, 1
      %p192 = scmp.lt.s32.totalorder %s16, 1
      %s193 = scalar_select %p192, %s16, 1
      %s194 = smul.addr %s193, 8
      %s195 = scalar_lea.vmem %s0, %s194
      %p196 = pneg %p37
      %p197 = pneg %p34
      %p198 = pneg %p58
      %p199 = pneg %p55
      %p200 = pneg %p79
      %p201 = pneg %p76
      %p202 = pneg %p100
      %p203 = pneg %p97
      %p204 = pneg %p121
      %p205 = pneg %p118
      %p206 = pneg %p147
      %p207 = pneg %p144
      %p208 = scmp.lt.s32.totalorder %s16, 1
      %s209 = scalar_select %p208, %s16, 1
      %s210 = smul.addr %s209, 8
      %s211 = scalar_lea.vmem %s5, %s210
      %p212 = scmp.lt.s32.totalorder %s16, 1
      %s213 = scalar_select %p212, %s16, 1
      %s214 = smul.addr %s213, 8
      %s215 = scalar_lea.vmem %s0, %s214
      %p216 = scmp.lt.s32.totalorder %s16, 1
      %s217 = scalar_select %p216, %s16, 1
      %s218 = smul.addr %s217, 8
      %s219 = scalar_lea.vmem %s5, %s218
      %v220 = vld [vmem:[%s215] sm:$0xff]
      %v221 = vld [vmem:[%s1] sm:$0xff]
      %v222 = vld [vmem:[%s1 + $0x8] sm:$0xff]
      %v223 = vld [vmem:[%s1 + $0x10] sm:$0xff]
      %v224 = vld [vmem:[%s1 + $0x18] sm:$0xff]
      %v225 = vld [vmem:[%s2] sm:$0x1]
      %v227 = vlaneseq
      %v228 = vshrl.u32 %v227, 7
      %v229 = vsub.s32 0, %v228
      %v230 = vrot.slane %v225, %v229
      %vm232 = vcmask 261120
      %v234 = vsel %vm232, %v220, 0
      %236 = vmatprep.subr.mxu0 0.0
      %237 = vmatpush1.msra.mxu0 %v221
      %238 = vmatprep.subr.mxu0 0.0
      %239 = vmatpush1.msra.mxu0 %v222
      %240 = vmatprep.subr.mxu0 0.0
      %241 = vmatpush1.msra.mxu0 %v223
      %242 = vmatprep.subr.mxu0 0.0
      %243 = vmatpush1.msra.mxu0 %v224
      %244 = vmatprep.subr.mxu0 0.0
      %245 = vmatpush1.msra.mxu0 0.0
      %246 = vmatprep.subr.mxu0 0.0
      %247 = vmatpush1.msra.mxu0 0.0
      %248 = vmatprep.subr.mxu0 0.0
      %249 = vmatpush1.msra.mxu0 0.0
      %250 = vmatprep.subr.mxu0 0.0
      %251 = vmatpush1.msra.mxu0 0.0
      %252 = vmatprep.subr.mxu0 0.0
      %253 = vmatpush1.msra.mxu0 0.0
      %254 = vmatprep.subr.mxu0 0.0
      %255 = vmatpush1.msra.mxu0 0.0
      %256 = vmatprep.subr.mxu0 0.0
      %257 = vmatpush1.msra.mxu0 0.0
      %258 = vmatprep.subr.mxu0 0.0
      %259 = vmatpush1.msra.mxu0 0.0
      %260 = vmatprep.subr.mxu0 0.0
      %261 = vmatpush1.msra.mxu0 0.0
      %262 = vmatprep.subr.mxu0 0.0
      %263 = vmatpush1.msra.mxu0 0.0
      %264 = vmatprep.subr.mxu0 0.0
      %265 = vmatpush1.msra.mxu0 0.0
      %266 = vmatprep.subr.mxu0 0.0
      %267 = vmatpush1.msra.mxu0 0.0
      %268 = vmatprep.subr.mxu0 0.0
      %269 = vmatpush1.msra.mxu0 0.0
      %270 = vmatprep.subr.mxu0 0.0
      %271 = vmatpush1.msra.mxu0 0.0
      %272 = vmatprep.subr.mxu0 0.0
      %273 = vmatpush1.msra.mxu0 0.0
      %274 = vmatprep.subr.mxu0 0.0
      %275 = vmatpush1.msra.mxu0 0.0
      %276 = vmatprep.subr.mxu0 0.0
      %277 = vmatpush1.msra.mxu0 0.0
      %278 = vmatprep.subr.mxu0 0.0
      %279 = vmatpush1.msra.mxu0 0.0
      %280 = vmatprep.subr.mxu0 0.0
      %281 = vmatpush1.msra.mxu0 0.0
      %282 = vmatprep.subr.mxu0 0.0
      %283 = vmatpush1.msra.mxu0 0.0
      %284 = vmatprep.subr.mxu0 0.0
      %285 = vmatpush1.msra.mxu0 0.0
      %286 = vmatprep.subr.mxu0 0.0
      %287 = vmatpush1.msra.mxu0 0.0
      %288 = vmatprep.subr.mxu0 0.0
      %289 = vmatpush1.msra.mxu0 0.0
      %290 = vmatprep.subr.mxu0 0.0
      %291 = vmatpush1.msra.mxu0 0.0
      %292 = vmatprep.subr.mxu0 0.0
      %293 = vmatpush1.msra.mxu0 0.0
      %294 = vmatprep.subr.mxu0 0.0
      %295 = vmatpush1.msra.mxu0 0.0
      %296 = vmatprep.subr.mxu0 0.0
      %297 = vmatpush1.msra.mxu0 0.0
      %298 = vmatprep.subr.mxu0 0.0
      %299 = vmatpush1.msra.mxu0 0.0
      %300 = vmatprep.mubr.f32.mxu0 0.0
      %301 = vmatmul.mubr.f32.gmra.mrb[0].mxu0 %v234
      %v302 = vpop.f32.mrb[0].mxu0
      %v303 = vadd.f32 %v230, %v302
      %v304 = vpop.f32.mrb[0].mxu0
      %305 = vdwg.mxu0
      %v306 = vtanh.pop %v303
      %v307 = vld [vmem:[%s3] sm:$0xff]
      %v308 = vld [vmem:[%s3 + $0x8] sm:$0xff]
      %v309 = vld [vmem:[%s3 + $0x10] sm:$0xff]
      %v310 = vld [vmem:[%s3 + $0x18] sm:$0xff]
      %v311 = vld [vmem:[%s3 + $0x20] sm:$0xff]
      %v312 = vld [vmem:[%s3 + $0x28] sm:$0xff]
      %v313 = vld [vmem:[%s3 + $0x30] sm:$0xff]
      %v314 = vld [vmem:[%s3 + $0x38] sm:$0xff]
      %v315 = vld [vmem:[%s3 + $0x40] sm:$0xff]
      %v316 = vld [vmem:[%s3 + $0x48] sm:$0xff]
      %v317 = vld [vmem:[%s3 + $0x50] sm:$0xff]
      %v318 = vld [vmem:[%s3 + $0x58] sm:$0xff]
      %v319 = vld [vmem:[%s3 + $0x60] sm:$0xff]
      %v320 = vld [vmem:[%s3 + $0x68] sm:$0xff]
      %v321 = vld [vmem:[%s3 + $0x70] sm:$0xff]
      %v322 = vld [vmem:[%s3 + $0x78] sm:$0xff]
      %v323 = vld [vmem:[%s4] sm:$0x1]
      %v325 = vlaneseq
      %v326 = vshrl.u32 %v325, 7
      %v327 = vsub.s32 0, %v326
      %v328 = vrot.slane %v323, %v327
      %330 = vmatprep.subr.mxu0 0.0
      %331 = vmatpush1.msra.mxu0 %v307
      %332 = vmatprep.subr.mxu0 0.0
      %333 = vmatpush1.msra.mxu0 %v308
      %334 = vmatprep.subr.mxu0 0.0
      %335 = vmatpush1.msra.mxu0 %v309
      %336 = vmatprep.subr.mxu0 0.0
      %337 = vmatpush1.msra.mxu0 %v310
      %338 = vmatprep.subr.mxu0 0.0
      %339 = vmatpush1.msra.mxu0 %v311
      %340 = vmatprep.subr.mxu0 0.0
      %341 = vmatpush1.msra.mxu0 %v312
      %342 = vmatprep.subr.mxu0 0.0
      %343 = vmatpush1.msra.mxu0 %v313
      %344 = vmatprep.subr.mxu0 0.0
      %345 = vmatpush1.msra.mxu0 %v314
      %346 = vmatprep.subr.mxu0 0.0
      %347 = vmatpush1.msra.mxu0 %v315
      %348 = vmatprep.subr.mxu0 0.0
      %349 = vmatpush1.msra.mxu0 %v316
      %350 = vmatprep.subr.mxu0 0.0
      %351 = vmatpush1.msra.mxu0 %v317
      %352 = vmatprep.subr.mxu0 0.0
      %353 = vmatpush1.msra.mxu0 %v318
      %354 = vmatprep.subr.mxu0 0.0
      %355 = vmatpush1.msra.mxu0 %v319
      %356 = vmatprep.subr.mxu0 0.0
      %357 = vmatpush1.msra.mxu0 %v320
      %358 = vmatprep.subr.mxu0 0.0
      %359 = vmatpush1.msra.mxu0 %v321
      %360 = vmatprep.subr.mxu0 0.0
      %361 = vmatpush1.msra.mxu0 %v322
      %362 = vmatprep.subr.mxu0 0.0
      %363 = vmatpush1.msra.mxu0 0.0
      %364 = vmatprep.subr.mxu0 0.0
      %365 = vmatpush1.msra.mxu0 0.0
      %366 = vmatprep.subr.mxu0 0.0
      %367 = vmatpush1.msra.mxu0 0.0
      %368 = vmatprep.subr.mxu0 0.0
      %369 = vmatpush1.msra.mxu0 0.0
      %370 = vmatprep.subr.mxu0 0.0
      %371 = vmatpush1.msra.mxu0 0.0
      %372 = vmatprep.subr.mxu0 0.0
      %373 = vmatpush1.msra.mxu0 0.0
      %374 = vmatprep.subr.mxu0 0.0
      %375 = vmatpush1.msra.mxu0 0.0
      %376 = vmatprep.subr.mxu0 0.0
      %377 = vmatpush1.msra.mxu0 0.0
      %378 = vmatprep.subr.mxu0 0.0
      %379 = vmatpush1.msra.mxu0 0.0
      %380 = vmatprep.subr.mxu0 0.0
      %381 = vmatpush1.msra.mxu0 0.0
      %382 = vmatprep.subr.mxu0 0.0
      %383 = vmatpush1.msra.mxu0 0.0
      %384 = vmatprep.subr.mxu0 0.0
      %385 = vmatpush1.msra.mxu0 0.0
      %386 = vmatprep.subr.mxu0 0.0
      %387 = vmatpush1.msra.mxu0 0.0
      %388 = vmatprep.subr.mxu0 0.0
      %389 = vmatpush1.msra.mxu0 0.0
      %390 = vmatprep.subr.mxu0 0.0
      %391 = vmatpush1.msra.mxu0 0.0
      %392 = vmatprep.subr.mxu0 0.0
      %393 = vmatpush1.msra.mxu0 0.0
      %394 = vmatprep.mubr.f32.mxu0 0.0
      %395 = vmatmul.mubr.f32.gmra.mrb[0].mxu0 %v306
      %v396 = vpop.f32.mrb[0].mxu0
      %v397 = vadd.f32 %v328, %v396
      %v398 = vpop.f32.mrb[0].mxu0
      %399 = vdwg.mxu0
      %400 = vst [vmem:[%s219] sm:$0xff] %v397
      %p401 = scmp.lt.s32.totalorder %s16, 1
      %s402 = scalar_select %p401, %s16, 1
      %s403 = smul.addr %s402, 8
      %s404 = scalar_lea.vmem %s5, %s403
      // Predicated region
      $region41: #{classifier_forward.1} parent=39 // pred_check
        %p405 = pneg %p144
      $region42: #{classifier_forward.1} parent=39 // pred_check_branch
        %407 = sbr.rel (%p405) target = $region44
      $region43: #{classifier_forward.1} parent=39 // pred_region
        _
      $region44: #{classifier_forward.1} parent=39 // pred_fallthru
        _
    $region40: #{classifier_forward.1} parent=5 // pred_fallthru
      _
    %p408 = scmp.le.s32.totalorder 2, %s11
    // Predicated region
    $region45: #{classifier_forward.1} parent=5 // pred_check
      %p409 = pneg %p408
    $region46: #{classifier_forward.1} parent=5 // pred_check_branch
      %411 = sbr.rel (%p409) target = $region48
    $region47: #{classifier_forward.1} parent=5 // pred_region
      %s412 = ssub.s32 %s11, 2
      // Predicated region
      $region49: #{classifier_forward.1} parent=47 // pred_check
        %p413 = pneg %p150
      $region50: #{classifier_forward.1} parent=47 // pred_check_branch
        %415 = sbr.rel (%p413) target = $region52
      $region51: #{classifier_forward.1} parent=47 // pred_region
        %p416 = scmp.lt.s32.totalorder %s17, 1
        %s417 = scalar_select %p416, %s17, 1
        %s418 = smul.addr %s417, 8
        %s419 = scalar_lea.vmem %s5, %s418
      $region52: #{classifier_forward.1} parent=47 // pred_fallthru
        _
    $region48: #{classifier_forward.1} parent=5 // pred_fallthru
      _
  $region6: #{classifier_forward.1} parent=0 // loop_footer
    %s15 = sadd.s32 1, %s11
  $region7: #{classifier_forward.1} parent=0 // loop_footer_branch
    %10 = sbr.rel target = $region3
  $region8: #{classifier_forward.1} parent=0 // loop_exit
    _

</llo_original>
